<compile_context>
chip_gen: v7x
topology: tpu7x:2x2x1
jax: 0.10.0
libtpu: 0.0.40
codegen_flags: <defaults>
</compile_context>

<pallas_src>
import functools

import jax
import jax.numpy as jnp
from jax import lax
from jax.experimental import pallas as pl
from jax.experimental.pallas import tpu as pltpu

_LANE = 128
_CHUNK = 32               # rows per fori_loop step: keeps live ranges to a few vregs
_MAX_ROW_TILE = 8192      # 8192 * 128 * 4 B = 4 MiB per f32 input block
_NUM_CORES = 2            # leading "parallel" grid axis (v7x: 2 TCs/chip)


def _round_up(a, b):
    return ((a + b - 1) // b) * b


def _cdiv(a, b):
    return (a + b - 1) // b


def _dice_focal_kernel(x_ref, t_ref, out_ref, *, rows, row_tile,
                       blocks_per_core, n_blocks, gamma, any_ragged):
    """Accumulates per-core partial sums into a (4, 8, 128) output slab.

    Slot 0: sum(sigmoid(x))      Slot 1: sum(t)
    Slot 2: sum(sigmoid(x) * t)  Slot 3: sum((1-pt)^gamma * BCE)
    (alpha and the normalizer are applied in the JAX epilogue.)
    """
    del n_blocks  # only used by the index_map
    c = pl.program_id(0)                 # core-parallel axis
    i = pl.program_id(1)                 # per-core reduction axis
    blk = c * blocks_per_core + i        # logical block id (may overhang)

    @pl.when(i == 0)
    def _():
        out_ref[...] = jnp.zeros_like(out_ref)

    n_chunks = row_tile // _CHUNK
    zero = jnp.zeros((8, _LANE), jnp.float32)
    g = float(gamma)

    def elementwise(xf, tf):
        # sigmoid + numerically-stable BCE-with-logits sharing one exp(-|x|).
        e = jnp.exp(-jnp.abs(xf))                        # EUP exp
        inv = 1.0 / (1.0 + e)
        p = jnp.where(xf >= 0.0, inv, e * inv)           # sigmoid(x)
        bce = jnp.maximum(xf, 0.0) - xf * tf + jnp.log1p(e)   # EUP log1p
        ptf = p * tf                                     # reused: intersection
        base = 1.0 - (p + tf) + 2.0 * ptf                # = 1 - pt
        if g == 1.0:
            mod = base
        elif g == 2.0:
            mod = base * base                            # VPU square, no pow()
        elif g == int(g) and 0.0 < g <= 8.0:
            mod = base
            for _ in range(int(g) - 1):
                mod = mod * base
        else:
            mod = jnp.power(base, g)                     # non-integer gamma only
        focal = mod * bce
        return p, tf, ptf, focal

    def fold(v):                                         # (_CHUNK,128) -> (8,128)
        return v.reshape(_CHUNK // 8, 8, _LANE).sum(axis=0)

    def accumulate(masked):
        def body(j, carry):
            a0, a1, a2, a3 = carry
            r0 = pl.multiple_of(j * _CHUNK, _CHUNK)
            xf = x_ref[pl.ds(r0, _CHUNK), :].astype(jnp.float32)
            tf = t_ref[pl.ds(r0, _CHUNK), :].astype(jnp.float32)
            p, tq, ptf, focal = elementwise(xf, tf)
            if masked:
                # Row-level validity mask (only the single partial block pays it).
                row_ids = lax.broadcasted_iota(jnp.int32, (_CHUNK, _LANE), 0)
                valid = (blk * row_tile + j * _CHUNK + row_ids) < rows
                p = jnp.where(valid, p, 0.0)
                tq = jnp.where(valid, tq, 0.0)
                ptf = jnp.where(valid, ptf, 0.0)
                focal = jnp.where(valid, focal, 0.0)
            return (a0 + fold(p), a1 + fold(tq), a2 + fold(ptf), a3 + fold(focal))

        a0, a1, a2, a3 = lax.fori_loop(0, n_chunks, body, (zero, zero, zero, zero),
                                       unroll=min(4, n_chunks))
        out_ref[0] += a0
        out_ref[1] += a1
        out_ref[2] += a2
        out_ref[3] += a3

    if not any_ragged:
        accumulate(masked=False)                         # fast path everywhere
    else:
        block_is_full = (blk + 1) * row_tile <= rows

        @pl.when(block_is_full)
        def _():
            accumulate(masked=False)

        @pl.when(jnp.logical_not(block_is_full) & (blk * row_tile < rows))
        def _():
            accumulate(masked=True)
        # blocks with blk*row_tile >= rows (overhang) contribute nothing.


def dice_focal_loss(logits, target, *, gamma=2.0, alpha=0.75):
    """JAX/Pallas equivalent of DiceFocalLoss.forward(input, target)."""
    x = logits.reshape(-1)                 # keep native dtype (bf16 ok)
    t = target.reshape(-1)
    n = x.shape[0]

    rows = n // _LANE
    tail = n - rows * _LANE

    sig_sum = jnp.float32(0.0)
    tgt_sum = jnp.float32(0.0)
    intersection = jnp.float32(0.0)
    focal_base = jnp.float32(0.0)

    if rows > 0:
        x2 = x[: rows * _LANE].reshape(rows, _LANE)      # metadata-only reshape
        t2 = t[: rows * _LANE].reshape(rows, _LANE)

        row_tile = min(_MAX_ROW_TILE, _round_up(rows, _CHUNK))
        n_blocks = _cdiv(rows, row_tile)
        bpc = _cdiv(n_blocks, _NUM_CORES)
        any_ragged = (rows % row_tile != 0) or (_NUM_CORES * bpc != n_blocks)

        def in_map(c, i):
            # Clamp so overhanging blocks re-read valid rows; their contribution
            # is skipped / masked inside the kernel.
            return (jnp.minimum(c * bpc + i, n_blocks - 1), 0)

        kernel = functools.partial(
            _dice_focal_kernel, rows=rows, row_tile=row_tile,
            blocks_per_core=bpc, n_blocks=n_blocks, gamma=float(gamma),
            any_ragged=any_ragged)

        elems = rows * _LANE
        cost = pl.CostEstimate(
            flops=25 * elems,
            transcendentals=3 * elems,
            bytes_accessed=(x2.dtype.itemsize + t2.dtype.itemsize) * elems
                           + 4 * _NUM_CORES * 8 * _LANE * 4)

        parts = pl.pallas_call(
            kernel,
            out_shape=jax.ShapeDtypeStruct((4, _NUM_CORES * 8, _LANE), jnp.float32),
            grid_spec=pltpu.PrefetchScalarGridSpec(
                num_scalar_prefetch=0,
                grid=(_NUM_CORES, bpc),
                in_specs=[
                    pl.BlockSpec((row_tile, _LANE), in_map),
                    pl.BlockSpec((row_tile, _LANE), in_map),
                ],
                out_specs=pl.BlockSpec((4, 8, _LANE), lambda c, i: (0, c, 0)),
            ),
            compiler_params=pltpu.CompilerParams(
                dimension_semantics=("parallel", "arbitrary"),
                vmem_limit_bytes=40 * 1024 * 1024),
            cost_estimate=cost,
        )(x2, t2)

        sums = jnp.sum(parts, axis=(1, 2))   # (4,) tiny epilogue reduction
        sig_sum, tgt_sum = sums[0], sums[1]
        intersection, focal_base = sums[2], sums[3]

    if tail:
        # <128-element lane tail handled in plain JAX (no O(N) pad copy).
        xt = x[rows * _LANE:].astype(jnp.float32)
        tt = t[rows * _LANE:].astype(jnp.float32)
        pt_ = jax.nn.sigmoid(xt)
        bce = jnp.maximum(xt, 0.0) - xt * tt + jnp.log1p(jnp.exp(-jnp.abs(xt)))
        ptq = (1.0 - pt_) * tt + pt_ * (1.0 - tt)
        sig_sum = sig_sum + jnp.sum(pt_)
        tgt_sum = tgt_sum + jnp.sum(tt)
        intersection = intersection + jnp.sum(pt_ * tt)
        focal_base = focal_base + jnp.sum((1.0 - ptq) ** gamma * bce)

    smooth = jnp.float32(1e-5)
    dice_loss = 1.0 - (2.0 * intersection + smooth) / (sig_sum + tgt_sum + smooth)
    # normalizer = target.sum(); if 0 -> number of elements in flattened input
    normalizer = jnp.where(tgt_sum == 0, jnp.float32(n), tgt_sum)
    focal_loss = jnp.float32(alpha) * focal_base / normalizer
    return 0.2 * dice_loss + 0.8 * focal_loss


def _reference(logits, target, *, gamma=2.0, alpha=0.75):
    """Pure-JAX reference mirroring the PyTorch forward."""
    x = logits.reshape(-1).astype(jnp.float32)
    t = target.reshape(-1).astype(jnp.float32)
    smooth = 1e-5
    p = jax.nn.sigmoid(x)
    intersection = jnp.sum(p * t)
    dice = 1.0 - (2.0 * intersection + smooth) / (jnp.sum(p) + jnp.sum(t) + smooth)
    normalizer = jnp.where(jnp.sum(t) == 0, jnp.float32(x.shape[0]), jnp.sum(t))
    bce = jnp.maximum(x, 0.0) - x * t + jnp.log1p(jnp.exp(-jnp.abs(x)))
    pt = (1.0 - p) * t + p * (1.0 - t)
    focal = jnp.sum(alpha * (1.0 - pt) ** gamma * bce / normalizer)
    return 0.2 * dice + 0.8 * focal


if __name__ == "__main__":
    key = jax.random.PRNGKey(0)
    k1, k2, k3, k4 = jax.random.split(key, 4)

    # Small shapes consistent with the module's segmentation-style usage.
    x = jax.random.normal(k1, (2, 4, 16, 16), dtype=jnp.float32)          # logits
    tgt = (jax.random.uniform(k2, (2, 4, 16, 16)) > 0.5).astype(jnp.float32)

    loss = dice_focal_loss(x, tgt, gamma=2.0, alpha=0.75)
    loss = jax.block_until_ready(loss)
    ref = _reference(x, tgt, gamma=2.0, alpha=0.75)
    assert jnp.allclose(loss, ref, rtol=1e-4, atol=1e-5), (loss, ref)

    # Ragged size: exercises the masked partial block + the <128-element tail.
    x2 = jax.random.normal(k3, (7, 300), dtype=jnp.float32)
    t2 = (jax.random.uniform(k4, (7, 300)) > 0.5).astype(jnp.float32)
    loss2 = jax.block_until_ready(dice_focal_loss(x2, t2, gamma=2.0, alpha=0.75))
    ref2 = _reference(x2, t2, gamma=2.0, alpha=0.75)
    assert jnp.allclose(loss2, ref2, rtol=1e-4, atol=1e-5), (loss2, ref2)

    print("KERNEL_OK")
</pallas_src>

<mosaic_0001>
module attributes {stable_mosaic.version = 11 : i64} {
  func.func @_dice_focal_kernel(%arg0: i32, %arg1: i32, %arg2: memref<32x128xf32, #tpu.memory_space<vmem>>, %arg3: memref<32x128xf32, #tpu.memory_space<vmem>>, %arg4: memref<4x8x128xf32, #tpu.memory_space<vmem>>) attributes {dimension_semantics = [#tpu.dimension_semantics<parallel>, #tpu.dimension_semantics<arbitrary>], iteration_bounds = array<i64: 2, 1>, scalar_prefetch = 0 : i64, scratch_operands = 0 : i64, tpu.core_type = #tpu.core_type<tc>, window_params = [{transform_indices = @transform_0, window_bounds = array<i64: 32, 128>}, {transform_indices = @transform_1, window_bounds = array<i64: 32, 128>}, {transform_indices = @transform_2, window_bounds = array<i64: 4, 8, 128>}]} {
    %c1_i32 = arith.constant 1 : i32
    %0 = arith.muli %arg0, %c1_i32 : i32
    %1 = arith.addi %0, %arg1 : i32
    %c0_i32 = arith.constant 0 : i32
    %2 = arith.cmpi eq, %arg1, %c0_i32 : i32
    %3 = arith.extui %2 : i1 to i32
    %c0_i32_0 = arith.constant 0 : i32
    %4 = arith.cmpi ne, %3, %c0_i32_0 : i32
    scf.if %4 {
      %cst_6 = arith.constant 0.000000e+00 : f32
      %17 = vector.broadcast %cst_6 : f32 to vector<4x8x128xf32>
      %c0 = arith.constant 0 : index
      %c0_7 = arith.constant 0 : index
      %c0_8 = arith.constant 0 : index
      %18 = vector.load %arg4[%c0, %c0_7, %c0_8] : memref<4x8x128xf32, #tpu.memory_space<vmem>>, vector<4x8x128xf32>
      tpu.vector_store %arg4[%c0, %c0_7, %c0_8], %17 {strides = array<i32>} : memref<4x8x128xf32, #tpu.memory_space<vmem>>, vector<4x8x128xf32>,
    } else {
    }
    %cst = arith.constant 0.000000e+00 : f32
    %5 = vector.broadcast %cst : f32 to vector<8x128xf32>
    %c1_i32_1 = arith.constant 1 : i32
    %6 = arith.addi %1, %c1_i32_1 : i32
    %c32_i32 = arith.constant 32 : i32
    %7 = arith.muli %6, %c32_i32 : i32
    %c16_i32 = arith.constant 16 : i32
    %8 = arith.cmpi sle, %7, %c16_i32 : i32
    %9 = arith.extui %8 : i1 to i32
    %c0_i32_2 = arith.constant 0 : i32
    %10 = arith.cmpi ne, %9, %c0_i32_2 : i32
    scf.if %10 {
      %c0_i32_6 = arith.constant 0 : i32
      %c32_i32_7 = arith.constant 32 : i32
      %17 = arith.muli %c0_i32_6, %c32_i32_7 : i32
      %18 = tpu.assume_multiple %17, 32 : i32
      %19 = arith.index_cast %18 : i32 to index
      %c0 = arith.constant 0 : index
      %20 = vector.load %arg2[%19, %c0] : memref<32x128xf32, #tpu.memory_space<vmem>>, vector<32x128xf32>
      %21 = arith.index_cast %18 : i32 to index
      %c0_8 = arith.constant 0 : index
      %22 = vector.load %arg3[%21, %c0_8] : memref<32x128xf32, #tpu.memory_space<vmem>>, vector<32x128xf32>
      %23 = math.absf %20 : vector<32x128xf32>
      %cst_9 = arith.constant 0.000000e+00 : f32
      %24 = vector.broadcast %cst_9 : f32 to vector<32x128xf32>
      %25 = arith.subf %24, %23 : vector<32x128xf32>
      %26 = math.exp %25 : vector<32x128xf32>
      %cst_10 = arith.constant 1.000000e+00 : f32
      %27 = vector.broadcast %cst_10 : f32 to vector<32x128xf32>
      %28 = arith.addf %27, %26 : vector<32x128xf32>
      %cst_11 = arith.constant 1.000000e+00 : f32
      %29 = vector.broadcast %cst_11 : f32 to vector<32x128xf32>
      %30 = arith.divf %29, %28 : vector<32x128xf32>
      %cst_12 = arith.constant 0.000000e+00 : f32
      %31 = vector.broadcast %cst_12 : f32 to vector<32x128xf32>
      %32 = arith.cmpf oge, %20, %31 : vector<32x128xf32>
      %33 = arith.mulf %26, %30 : vector<32x128xf32>
      %34 = arith.select %32, %30, %33 : vector<32x128xi1>, vector<32x128xf32>
      %cst_13 = arith.constant 0.000000e+00 : f32
      %35 = vector.broadcast %cst_13 : f32 to vector<32x128xf32>
      %36 = arith.maximumf %20, %35 : vector<32x128xf32>
      %37 = arith.mulf %20, %22 : vector<32x128xf32>
      %38 = arith.subf %36, %37 : vector<32x128xf32>
      %39 = math.log1p %26 : vector<32x128xf32>
      %40 = arith.addf %38, %39 : vector<32x128xf32>
      %41 = arith.mulf %34, %22 : vector<32x128xf32>
      %42 = arith.addf %34, %22 : vector<32x128xf32>
      %cst_14 = arith.constant 1.000000e+00 : f32
      %43 = vector.broadcast %cst_14 : f32 to vector<32x128xf32>
      %44 = arith.subf %43, %42 : vector<32x128xf32>
      %cst_15 = arith.constant 2.000000e+00 : f32
      %45 = vector.broadcast %cst_15 : f32 to vector<32x128xf32>
      %46 = arith.mulf %45, %41 : vector<32x128xf32>
      %47 = arith.addf %44, %46 : vector<32x128xf32>
      %48 = arith.mulf %47, %47 : vector<32x128xf32>
      %49 = arith.mulf %48, %40 : vector<32x128xf32>
      %50 = vector.shape_cast %34 : vector<32x128xf32> to vector<4x8x128xf32>
      %cst_16 = arith.constant dense<0.000000e+00> : vector<8x128xf32>
      %51 = vector.multi_reduction <add>, %50, %cst_16 [0] : vector<4x8x128xf32> to vector<8x128xf32>
      %52 = arith.addf %5, %51 : vector<8x128xf32>
      %53 = vector.shape_cast %22 : vector<32x128xf32> to vector<4x8x128xf32>
      %cst_17 = arith.constant dense<0.000000e+00> : vector<8x128xf32>
      %54 = vector.multi_reduction <add>, %53, %cst_17 [0] : vector<4x8x128xf32> to vector<8x128xf32>
      %55 = arith.addf %5, %54 : vector<8x128xf32>
      %56 = vector.shape_cast %41 : vector<32x128xf32> to vector<4x8x128xf32>
      %cst_18 = arith.constant dense<0.000000e+00> : vector<8x128xf32>
      %57 = vector.multi_reduction <add>, %56, %cst_18 [0] : vector<4x8x128xf32> to vector<8x128xf32>
      %58 = arith.addf %5, %57 : vector<8x128xf32>
      %59 = vector.shape_cast %49 : vector<32x128xf32> to vector<4x8x128xf32>
      %cst_19 = arith.constant dense<0.000000e+00> : vector<8x128xf32>
      %60 = vector.multi_reduction <add>, %59, %cst_19 [0] : vector<4x8x128xf32> to vector<8x128xf32>
      %61 = arith.addf %5, %60 : vector<8x128xf32>
      %c1_i32_20 = arith.constant 1 : i32
      %c0_21 = arith.constant 0 : index
      %c0_22 = arith.constant 0 : index
      %c0_23 = arith.constant 0 : index
      %62 = vector.load %arg4[%c0_21, %c0_22, %c0_23] : memref<4x8x128xf32, #tpu.memory_space<vmem>>, vector<1x8x128xf32>
      %63 = vector.shape_cast %62 : vector<1x8x128xf32> to vector<8x128xf32>
      %64 = arith.addf %63, %52 : vector<8x128xf32>
      %c0_24 = arith.constant 0 : index
      %c0_25 = arith.constant 0 : index
      %c0_26 = arith.constant 0 : index
      %65 = vector.load %arg4[%c0_24, %c0_25, %c0_26] : memref<4x8x128xf32, #tpu.memory_space<vmem>>, vector<1x8x128xf32>
      %66 = vector.shape_cast %65 : vector<1x8x128xf32> to vector<8x128xf32>
      %67 = vector.shape_cast %64 : vector<8x128xf32> to vector<1x8x128xf32>
      tpu.vector_store %arg4[%c0_24, %c0_25, %c0_26], %67 {strides = array<i32>} : memref<4x8x128xf32, #tpu.memory_space<vmem>>, vector<1x8x128xf32>,
      %c1 = arith.constant 1 : index
      %c0_27 = arith.constant 0 : index
      %c0_28 = arith.constant 0 : index
      %68 = vector.load %arg4[%c1, %c0_27, %c0_28] : memref<4x8x128xf32, #tpu.memory_space<vmem>>, vector<1x8x128xf32>
      %69 = vector.shape_cast %68 : vector<1x8x128xf32> to vector<8x128xf32>
      %70 = arith.addf %69, %55 : vector<8x128xf32>
      %c1_29 = arith.constant 1 : index
      %c0_30 = arith.constant 0 : index
      %c0_31 = arith.constant 0 : index
      %71 = vector.load %arg4[%c1_29, %c0_30, %c0_31] : memref<4x8x128xf32, #tpu.memory_space<vmem>>, vector<1x8x128xf32>
      %72 = vector.shape_cast %71 : vector<1x8x128xf32> to vector<8x128xf32>
      %73 = vector.shape_cast %70 : vector<8x128xf32> to vector<1x8x128xf32>
      tpu.vector_store %arg4[%c1_29, %c0_30, %c0_31], %73 {strides = array<i32>} : memref<4x8x128xf32, #tpu.memory_space<vmem>>, vector<1x8x128xf32>,
      %c2 = arith.constant 2 : index
      %c0_32 = arith.constant 0 : index
      %c0_33 = arith.constant 0 : index
      %74 = vector.load %arg4[%c2, %c0_32, %c0_33] : memref<4x8x128xf32, #tpu.memory_space<vmem>>, vector<1x8x128xf32>
      %75 = vector.shape_cast %74 : vector<1x8x128xf32> to vector<8x128xf32>
      %76 = arith.addf %75, %58 : vector<8x128xf32>
      %c2_34 = arith.constant 2 : index
      %c0_35 = arith.constant 0 : index
      %c0_36 = arith.constant 0 : index
      %77 = vector.load %arg4[%c2_34, %c0_35, %c0_36] : memref<4x8x128xf32, #tpu.memory_space<vmem>>, vector<1x8x128xf32>
      %78 = vector.shape_cast %77 : vector<1x8x128xf32> to vector<8x128xf32>
      %79 = vector.shape_cast %76 : vector<8x128xf32> to vector<1x8x128xf32>
      tpu.vector_store %arg4[%c2_34, %c0_35, %c0_36], %79 {strides = array<i32>} : memref<4x8x128xf32, #tpu.memory_space<vmem>>, vector<1x8x128xf32>,
      %c3 = arith.constant 3 : index
      %c0_37 = arith.constant 0 : index
      %c0_38 = arith.constant 0 : index
      %80 = vector.load %arg4[%c3, %c0_37, %c0_38] : memref<4x8x128xf32, #tpu.memory_space<vmem>>, vector<1x8x128xf32>
      %81 = vector.shape_cast %80 : vector<1x8x128xf32> to vector<8x128xf32>
      %82 = arith.addf %81, %61 : vector<8x128xf32>
      %c3_39 = arith.constant 3 : index
      %c0_40 = arith.constant 0 : index
      %c0_41 = arith.constant 0 : index
      %83 = vector.load %arg4[%c3_39, %c0_40, %c0_41] : memref<4x8x128xf32, #tpu.memory_space<vmem>>, vector<1x8x128xf32>
      %84 = vector.shape_cast %83 : vector<1x8x128xf32> to vector<8x128xf32>
      %85 = vector.shape_cast %82 : vector<8x128xf32> to vector<1x8x128xf32>
      tpu.vector_store %arg4[%c3_39, %c0_40, %c0_41], %85 {strides = array<i32>} : memref<4x8x128xf32, #tpu.memory_space<vmem>>, vector<1x8x128xf32>,
    } else {
    }
    %true = arith.constant true
    %11 = arith.xori %8, %true : i1
    %c32_i32_3 = arith.constant 32 : i32
    %12 = arith.muli %1, %c32_i32_3 : i32
    %c16_i32_4 = arith.constant 16 : i32
    %13 = arith.cmpi slt, %12, %c16_i32_4 : i32
    %14 = arith.andi %11, %13 : i1
    %15 = arith.extui %14 : i1 to i32
    %c0_i32_5 = arith.constant 0 : i32
    %16 = arith.cmpi ne, %15, %c0_i32_5 : i32
    scf.if %16 {
      %c0_i32_6 = arith.constant 0 : i32
      %c32_i32_7 = arith.constant 32 : i32
      %17 = arith.muli %c0_i32_6, %c32_i32_7 : i32
      %18 = tpu.assume_multiple %17, 32 : i32
      %19 = arith.index_cast %18 : i32 to index
      %c0 = arith.constant 0 : index
      %20 = vector.load %arg2[%19, %c0] : memref<32x128xf32, #tpu.memory_space<vmem>>, vector<32x128xf32>
      %21 = arith.index_cast %18 : i32 to index
      %c0_8 = arith.constant 0 : index
      %22 = vector.load %arg3[%21, %c0_8] : memref<32x128xf32, #tpu.memory_space<vmem>>, vector<32x128xf32>
      %23 = math.absf %20 : vector<32x128xf32>
      %cst_9 = arith.constant 0.000000e+00 : f32
      %24 = vector.broadcast %cst_9 : f32 to vector<32x128xf32>
      %25 = arith.subf %24, %23 : vector<32x128xf32>
      %26 = math.exp %25 : vector<32x128xf32>
      %cst_10 = arith.constant 1.000000e+00 : f32
      %27 = vector.broadcast %cst_10 : f32 to vector<32x128xf32>
      %28 = arith.addf %27, %26 : vector<32x128xf32>
      %cst_11 = arith.constant 1.000000e+00 : f32
      %29 = vector.broadcast %cst_11 : f32 to vector<32x128xf32>
      %30 = arith.divf %29, %28 : vector<32x128xf32>
      %cst_12 = arith.constant 0.000000e+00 : f32
      %31 = vector.broadcast %cst_12 : f32 to vector<32x128xf32>
      %32 = arith.cmpf oge, %20, %31 : vector<32x128xf32>
      %33 = arith.mulf %26, %30 : vector<32x128xf32>
      %34 = arith.select %32, %30, %33 : vector<32x128xi1>, vector<32x128xf32>
      %cst_13 = arith.constant 0.000000e+00 : f32
      %35 = vector.broadcast %cst_13 : f32 to vector<32x128xf32>
      %36 = arith.maximumf %20, %35 : vector<32x128xf32>
      %37 = arith.mulf %20, %22 : vector<32x128xf32>
      %38 = arith.subf %36, %37 : vector<32x128xf32>
      %39 = math.log1p %26 : vector<32x128xf32>
      %40 = arith.addf %38, %39 : vector<32x128xf32>
      %41 = arith.mulf %34, %22 : vector<32x128xf32>
      %42 = arith.addf %34, %22 : vector<32x128xf32>
      %cst_14 = arith.constant 1.000000e+00 : f32
      %43 = vector.broadcast %cst_14 : f32 to vector<32x128xf32>
      %44 = arith.subf %43, %42 : vector<32x128xf32>
      %cst_15 = arith.constant 2.000000e+00 : f32
      %45 = vector.broadcast %cst_15 : f32 to vector<32x128xf32>
      %46 = arith.mulf %45, %41 : vector<32x128xf32>
      %47 = arith.addf %44, %46 : vector<32x128xf32>
      %48 = arith.mulf %47, %47 : vector<32x128xf32>
      %49 = arith.mulf %48, %40 : vector<32x128xf32>
      %50 = tpu.iota {dimensions = array<i32: 0>} : vector<32x128xi32>
      %c32_i32_16 = arith.constant 32 : i32
      %51 = arith.muli %1, %c32_i32_16 : i32
      %c32_i32_17 = arith.constant 32 : i32
      %52 = arith.muli %c0_i32_6, %c32_i32_17 : i32
      %53 = arith.addi %51, %52 : i32
      %54 = vector.broadcast %53 : i32 to vector<32x128xi32>
      %55 = arith.addi %54, %50 : vector<32x128xi32>
      %c16_i32_18 = arith.constant 16 : i32
      %56 = vector.broadcast %c16_i32_18 : i32 to vector<32x128xi32>
      %57 = arith.cmpi slt, %55, %56 : vector<32x128xi32>
      %cst_19 = arith.constant 0.000000e+00 : f32
      %58 = vector.broadcast %cst_19 : f32 to vector<32x128xf32>
      %59 = arith.select %57, %34, %58 : vector<32x128xi1>, vector<32x128xf32>
      %cst_20 = arith.constant 0.000000e+00 : f32
      %60 = vector.broadcast %cst_20 : f32 to vector<32x128xf32>
      %61 = arith.select %57, %22, %60 : vector<32x128xi1>, vector<32x128xf32>
      %cst_21 = arith.constant 0.000000e+00 : f32
      %62 = vector.broadcast %cst_21 : f32 to vector<32x128xf32>
      %63 = arith.select %57, %41, %62 : vector<32x128xi1>, vector<32x128xf32>
      %cst_22 = arith.constant 0.000000e+00 : f32
      %64 = vector.broadcast %cst_22 : f32 to vector<32x128xf32>
      %65 = arith.select %57, %49, %64 : vector<32x128xi1>, vector<32x128xf32>
      %66 = vector.shape_cast %59 : vector<32x128xf32> to vector<4x8x128xf32>
      %cst_23 = arith.constant dense<0.000000e+00> : vector<8x128xf32>
      %67 = vector.multi_reduction <add>, %66, %cst_23 [0] : vector<4x8x128xf32> to vector<8x128xf32>
      %68 = arith.addf %5, %67 : vector<8x128xf32>
      %69 = vector.shape_cast %61 : vector<32x128xf32> to vector<4x8x128xf32>
      %cst_24 = arith.constant dense<0.000000e+00> : vector<8x128xf32>
      %70 = vector.multi_reduction <add>, %69, %cst_24 [0] : vector<4x8x128xf32> to vector<8x128xf32>
      %71 = arith.addf %5, %70 : vector<8x128xf32>
      %72 = vector.shape_cast %63 : vector<32x128xf32> to vector<4x8x128xf32>
      %cst_25 = arith.constant dense<0.000000e+00> : vector<8x128xf32>
      %73 = vector.multi_reduction <add>, %72, %cst_25 [0] : vector<4x8x128xf32> to vector<8x128xf32>
      %74 = arith.addf %5, %73 : vector<8x128xf32>
      %75 = vector.shape_cast %65 : vector<32x128xf32> to vector<4x8x128xf32>
      %cst_26 = arith.constant dense<0.000000e+00> : vector<8x128xf32>
      %76 = vector.multi_reduction <add>, %75, %cst_26 [0] : vector<4x8x128xf32> to vector<8x128xf32>
      %77 = arith.addf %5, %76 : vector<8x128xf32>
      %c1_i32_27 = arith.constant 1 : i32
      %c0_28 = arith.constant 0 : index
      %c0_29 = arith.constant 0 : index
      %c0_30 = arith.constant 0 : index
      %78 = vector.load %arg4[%c0_28, %c0_29, %c0_30] : memref<4x8x128xf32, #tpu.memory_space<vmem>>, vector<1x8x128xf32>
      %79 = vector.shape_cast %78 : vector<1x8x128xf32> to vector<8x128xf32>
      %80 = arith.addf %79, %68 : vector<8x128xf32>
      %c0_31 = arith.constant 0 : index
      %c0_32 = arith.constant 0 : index
      %c0_33 = arith.constant 0 : index
      %81 = vector.load %arg4[%c0_31, %c0_32, %c0_33] : memref<4x8x128xf32, #tpu.memory_space<vmem>>, vector<1x8x128xf32>
      %82 = vector.shape_cast %81 : vector<1x8x128xf32> to vector<8x128xf32>
      %83 = vector.shape_cast %80 : vector<8x128xf32> to vector<1x8x128xf32>
      tpu.vector_store %arg4[%c0_31, %c0_32, %c0_33], %83 {strides = array<i32>} : memref<4x8x128xf32, #tpu.memory_space<vmem>>, vector<1x8x128xf32>,
      %c1 = arith.constant 1 : index
      %c0_34 = arith.constant 0 : index
      %c0_35 = arith.constant 0 : index
      %84 = vector.load %arg4[%c1, %c0_34, %c0_35] : memref<4x8x128xf32, #tpu.memory_space<vmem>>, vector<1x8x128xf32>
      %85 = vector.shape_cast %84 : vector<1x8x128xf32> to vector<8x128xf32>
      %86 = arith.addf %85, %71 : vector<8x128xf32>
      %c1_36 = arith.constant 1 : index
      %c0_37 = arith.constant 0 : index
      %c0_38 = arith.constant 0 : index
      %87 = vector.load %arg4[%c1_36, %c0_37, %c0_38] : memref<4x8x128xf32, #tpu.memory_space<vmem>>, vector<1x8x128xf32>
      %88 = vector.shape_cast %87 : vector<1x8x128xf32> to vector<8x128xf32>
      %89 = vector.shape_cast %86 : vector<8x128xf32> to vector<1x8x128xf32>
      tpu.vector_store %arg4[%c1_36, %c0_37, %c0_38], %89 {strides = array<i32>} : memref<4x8x128xf32, #tpu.memory_space<vmem>>, vector<1x8x128xf32>,
      %c2 = arith.constant 2 : index
      %c0_39 = arith.constant 0 : index
      %c0_40 = arith.constant 0 : index
      %90 = vector.load %arg4[%c2, %c0_39, %c0_40] : memref<4x8x128xf32, #tpu.memory_space<vmem>>, vector<1x8x128xf32>
      %91 = vector.shape_cast %90 : vector<1x8x128xf32> to vector<8x128xf32>
      %92 = arith.addf %91, %74 : vector<8x128xf32>
      %c2_41 = arith.constant 2 : index
      %c0_42 = arith.constant 0 : index
      %c0_43 = arith.constant 0 : index
      %93 = vector.load %arg4[%c2_41, %c0_42, %c0_43] : memref<4x8x128xf32, #tpu.memory_space<vmem>>, vector<1x8x128xf32>
      %94 = vector.shape_cast %93 : vector<1x8x128xf32> to vector<8x128xf32>
      %95 = vector.shape_cast %92 : vector<8x128xf32> to vector<1x8x128xf32>
      tpu.vector_store %arg4[%c2_41, %c0_42, %c0_43], %95 {strides = array<i32>} : memref<4x8x128xf32, #tpu.memory_space<vmem>>, vector<1x8x128xf32>,
      %c3 = arith.constant 3 : index
      %c0_44 = arith.constant 0 : index
      %c0_45 = arith.constant 0 : index
      %96 = vector.load %arg4[%c3, %c0_44, %c0_45] : memref<4x8x128xf32, #tpu.memory_space<vmem>>, vector<1x8x128xf32>
      %97 = vector.shape_cast %96 : vector<1x8x128xf32> to vector<8x128xf32>
      %98 = arith.addf %97, %77 : vector<8x128xf32>
      %c3_46 = arith.constant 3 : index
      %c0_47 = arith.constant 0 : index
      %c0_48 = arith.constant 0 : index
      %99 = vector.load %arg4[%c3_46, %c0_47, %c0_48] : memref<4x8x128xf32, #tpu.memory_space<vmem>>, vector<1x8x128xf32>
      %100 = vector.shape_cast %99 : vector<1x8x128xf32> to vector<8x128xf32>
      %101 = vector.shape_cast %98 : vector<8x128xf32> to vector<1x8x128xf32>
      tpu.vector_store %arg4[%c3_46, %c0_47, %c0_48], %101 {strides = array<i32>} : memref<4x8x128xf32, #tpu.memory_space<vmem>>, vector<1x8x128xf32>,
    } else {
    }
    return
  }
  func.func @transform_0(%arg0: i32, %arg1: i32) -> (i32, i32) {
    %c1_i32 = arith.constant 1 : i32
    %0 = arith.muli %arg0, %c1_i32 : i32
    %1 = arith.addi %0, %arg1 : i32
    %c0_i32 = arith.constant 0 : i32
    %2 = arith.minsi %1, %c0_i32 : i32
    %c0_i32_0 = arith.constant 0 : i32
    %c0_i32_1 = arith.constant 0 : i32
    return %2, %c0_i32_0 : i32, i32
  }
  func.func @transform_1(%arg0: i32, %arg1: i32) -> (i32, i32) {
    %c1_i32 = arith.constant 1 : i32
    %0 = arith.muli %arg0, %c1_i32 : i32
    %1 = arith.addi %0, %arg1 : i32
    %c0_i32 = arith.constant 0 : i32
    %2 = arith.minsi %1, %c0_i32 : i32
    %c0_i32_0 = arith.constant 0 : i32
    %c0_i32_1 = arith.constant 0 : i32
    return %2, %c0_i32_0 : i32, i32
  }
  func.func @transform_2(%arg0: i32, %arg1: i32) -> (i32, i32, i32) {
    %c0_i32 = arith.constant 0 : i32
    %c0_i32_0 = arith.constant 0 : i32
    %c0_i32_1 = arith.constant 0 : i32
    return %c0_i32, %arg0, %c0_i32_0 : i32, i32, i32
  }
}

</mosaic_0001>

<llo_original>
// kernel: tpu_custom_call.1
$region0: #{tpu_custom_call.1}
  #allocation0 [shape = 'u32[]', space=smem, size = 0x4, offset = 0x4, fixed_abs, tag = 'smem constant byte address 0x4 - core index']
  #allocation1 [shape = 'u32[144,128]{1,0:T(1,128)}', space=vmem, size = 0x12000, scoped, tag = 'internal scratch']
  %s0 = inlined_call_operand.hbm [shape: f32[16,128], index: 0, kind: input, shape index: {}]
  %s1 = inlined_call_operand.hbm [shape: f32[16,128], index: 1, kind: input, shape index: {}]
  %s2 = inlined_call_operand.hbm [shape: f32[4,16,128], index: 2, kind: output, shape index: {}]
  %s3 = sld [smem:[#allocation0]]
  $region61: #{tpu_custom_call.1} parent=0
    _
  %s5 = ssub.s32 1, %s3
  %s6 = scalar_select 0, %s5, %s3
  $region1: #{tpu_custom_call.1} parent=0
    #allocation2 [shape = 'u8[32768]{0}', space=vmem, size = 0x8000, scoped, tag = 'input window, operand 0']
    #allocation3 [shape = 's32[2]{0}', space=sflag, size = 0x8, scoped, tag = 'scoped memory for tpu_custom_call.1']
    #allocation4 [shape = 's32[2]{0}', space=sflag, size = 0x8, scoped, tag = 'scoped memory for tpu_custom_call.1']
    #allocation5 [shape = 'u8[32768]{0}', space=vmem, size = 0x8000, scoped, tag = 'input window, operand 1']
    #allocation6 [shape = 's32[2]{0}', space=sflag, size = 0x8, scoped, tag = 'scoped memory for tpu_custom_call.1']
    #allocation7 [shape = 'u8[32768]{0}', space=vmem, size = 0x8000, scoped, tag = 'output window, operand 0']
    %7 = vsyncpa [#allocation3], 0
    %s8 = scalar_lea.sflag [#allocation3], 1
    %9 = vsyncpa %s8, 0
    %10 = vsyncpa [#allocation6], 0
    %s11 = scalar_lea.sflag [#allocation6], 1
    %12 = vsyncpa %s11, 0
    %13 = vsyncpa [#allocation4], 0
    %s14 = scalar_lea.sflag [#allocation4], 1
    %15 = vsyncpa %s14, 0
    loop: start=0, step=1, limit=4
    $region2: #{tpu_custom_call.1} parent=1 // loop_pre_header
      _
    $region3: #{tpu_custom_call.1} parent=1 // loop_header
      %s17 = sphi 0, %s21
      %p18 = scmp.ge.s32.totalorder %s17, 4
      %s24 = sphi 0, %s36
      %s25 = sphi 0, %s32
      %s26 = sphi 0, %s24
      %s27 = sphi 0, %s25
      %s28 = sphi 0, %s26
      %s29 = sphi 0, %s27
      %s45 = sphi 0, %s47
      %s48 = sphi 0, %s45
      %s49 = sphi 0, %s48
      %s65 = sphi 0, %s49
      %s77 = sphi 0, %s79
      %s80 = sphi 0, %s77
      %s81 = sphi 0, %s80
      %s97 = sphi 0, %s81
      %s103 = sphi 0, %s105
      %s106 = sphi 0, %s103
      %s107 = sphi 0, %s106
      %s123 = sphi 0, %s107
    $region4: #{tpu_custom_call.1} parent=1 // loop_header_branch
      %20 = sbr.rel (%p18) target = $region8
    $region5: #{tpu_custom_call.1} parent=1 // loop_body
      %s22 = ssub.s32 %s17, 1
      %s23 = ssub.s32 %s17, 2
      %s30 = sadd.s32 1, %s25
      %p31 = scmp.ge.s32.totalorder %s30, 1
      %s32 = scalar_select %p31, 0, %s30
      %s33 = sadd.s32 1, %s24
      %s34 = scalar_select %p31, %s33, %s24
      %p35 = scmp.ge.s32.totalorder %s34, 2
      %s36 = scalar_select %p35, 0, %s34
      %s37 = sadd.s32 %s24, %s25
      %p38 = scmp.lt.s32.totalorder %s37, 0
      %s39 = scalar_select %p38, %s37, 0
      %s40 = sadd.s32 %s36, %s32
      %p41 = scmp.lt.s32.totalorder %s40, 0
      %s42 = scalar_select %p41, %s40, 0
      %s43 = ssub.s32 %s39, %s42
      %p44 = scmp.eq.s32.totalorder %s43, 0
      %s46 = sadd.s32 %s45, 1
      %s47 = scalar_select %p44, %s45, %s46
      %p50 = pneg %p44
      %p51 = scmp.eq.s32.totalorder %s17, 1
      %p52 = por %p50, %p51
      %p53 = scmp.ne.s32.totalorder %s45, %s48
      %p54 = scmp.eq.s32.totalorder %s17, 0
      %p55 = por %p53, %p54
      %p56 = scmp.ne.s32.totalorder %s45, %s48
      %p57 = scmp.eq.s32.totalorder %s22, 1
      %p58 = por %p56, %p57
      %p59 = scmp.ne.s32.totalorder %s48, %s49
      %p60 = scmp.eq.s32.totalorder %s22, 0
      %p61 = por %p59, %p60
      %p62 = scmp.ne.s32.totalorder %s48, %s49
      %p63 = scmp.eq.s32.totalorder %s23, 1
      %p64 = por %p62, %p63
      %p66 = scmp.ne.s32.totalorder %s49, %s65
      %p67 = scmp.eq.s32.totalorder %s23, 0
      %p68 = por %p66, %p67
      %s69 = sadd.s32 %s24, %s25
      %p70 = scmp.lt.s32.totalorder %s69, 0
      %s71 = scalar_select %p70, %s69, 0
      %s72 = sadd.s32 %s36, %s32
      %p73 = scmp.lt.s32.totalorder %s72, 0
      %s74 = scalar_select %p73, %s72, 0
      %s75 = ssub.s32 %s71, %s74
      %p76 = scmp.eq.s32.totalorder %s75, 0
      %s78 = sadd.s32 %s77, 1
      %s79 = scalar_select %p76, %s77, %s78
      %p82 = pneg %p76
      %p83 = scmp.eq.s32.totalorder %s17, 1
      %p84 = por %p82, %p83
      %p85 = scmp.ne.s32.totalorder %s77, %s80
      %p86 = scmp.eq.s32.totalorder %s17, 0
      %p87 = por %p85, %p86
      %p88 = scmp.ne.s32.totalorder %s77, %s80
      %p89 = scmp.eq.s32.totalorder %s22, 1
      %p90 = por %p88, %p89
      %p91 = scmp.ne.s32.totalorder %s80, %s81
      %p92 = scmp.eq.s32.totalorder %s22, 0
      %p93 = por %p91, %p92
      %p94 = scmp.ne.s32.totalorder %s80, %s81
      %p95 = scmp.eq.s32.totalorder %s23, 1
      %p96 = por %p94, %p95
      %p98 = scmp.ne.s32.totalorder %s81, %s97
      %p99 = scmp.eq.s32.totalorder %s23, 0
      %p100 = por %p98, %p99
      %s101 = ssub.s32 %s24, %s36
      %p102 = scmp.eq.s32.totalorder %s101, 0
      %s104 = sadd.s32 %s103, 1
      %s105 = scalar_select %p102, %s103, %s104
      %p108 = pneg %p102
      %p109 = scmp.eq.s32.totalorder %s17, 1
      %p110 = por %p108, %p109
      %p111 = scmp.ne.s32.totalorder %s103, %s106
      %p112 = scmp.eq.s32.totalorder %s17, 0
      %p113 = por %p111, %p112
      %p114 = scmp.ne.s32.totalorder %s103, %s106
      %p115 = scmp.eq.s32.totalorder %s22, 1
      %p116 = por %p114, %p115
      %p117 = scmp.ne.s32.totalorder %s106, %s107
      %p118 = scmp.eq.s32.totalorder %s22, 0
      %p119 = por %p117, %p118
      %p120 = scmp.ne.s32.totalorder %s106, %s107
      %p121 = scmp.eq.s32.totalorder %s23, 1
      %p122 = por %p120, %p121
      %p124 = scmp.ne.s32.totalorder %s107, %s123
      %p125 = scmp.eq.s32.totalorder %s23, 0
      %p126 = por %p124, %p125
      %p127 = scmp.le.s32.totalorder 1, %s17
      %p128 = scmp.lt.s32.totalorder %s17, 3
      %p129 = pnand %p127, %p128
      %p130 = pneg %p129
      // Predicated region
      $region9: #{tpu_custom_call.1} parent=5 // pred_check
        _
      $region10: #{tpu_custom_call.1} parent=5 // pred_check_branch
        %132 = sbr.rel (%p129) target = $region12
      $region11: #{tpu_custom_call.1} parent=5 // pred_region
        %s133 = ssub.s32 %s17, 1
      $region12: #{tpu_custom_call.1} parent=5 // pred_fallthru
        _
      %p134 = scmp.lt.s32.totalorder %s17, 2
      // Predicated region
      $region13: #{tpu_custom_call.1} parent=5 // pred_check
        %p135 = pneg %p134
      $region14: #{tpu_custom_call.1} parent=5 // pred_check_branch
        %137 = sbr.rel (%p135) target = $region16
      $region15: #{tpu_custom_call.1} parent=5 // pred_region
        // Predicated region
        $region17: #{tpu_custom_call.1} parent=15 // pred_check
          %p138 = pneg %p55
        $region18: #{tpu_custom_call.1} parent=15 // pred_check_branch
          %140 = sbr.rel (%p138) target = $region20
        $region19: #{tpu_custom_call.1} parent=15 // pred_region
          %s141 = sand.u32 %s45, 1
          %s142 = scalar_lea.sflag [#allocation3], %s141
          %s143 = sand.u32 %s45, 1
          %s144 = smul.addr %s143, 32
          %s145 = scalar_lea.vmem [#allocation2], %s144
          %s146 = sadd.s32 %s24, %s25
          %p147 = scmp.lt.s32.totalorder %s146, 0
          %s148 = scalar_select %p147, %s146, 0
          %s149 = smul.u32 4, %s148
          %s150 = ssub.s32 2, %s149
          %s151 = smul.u32 128, %s150
          %s153 = ssub.s32 512, %s151
          %154 = vsyncadd %s142, %s153
          %p155 = scmp.ne.s32.totalorder 0, %s151
          %s156 = smul.addr %s149, 128
          %s157 = scalar_lea.hbm %s0, %s156
          %s158 = smul.u32 8, %s150
          %s159 = sshll.u32 %s145, 4
          %s160 = int_to_ptr.vmem [resolvable:$true] %s159
          %s161 = sshll.u32 %s158, 4
          %165 = dma.hbm_to_vmem [thread:$0]  (%p155), %s157, %s161, %s160, %s142, 128, 128, 8
        $region20: #{tpu_custom_call.1} parent=15 // pred_fallthru
          _
        // Predicated region
        $region21: #{tpu_custom_call.1} parent=15 // pred_check
          %p166 = pneg %p87
        $region22: #{tpu_custom_call.1} parent=15 // pred_check_branch
          %168 = sbr.rel (%p166) target = $region24
        $region23: #{tpu_custom_call.1} parent=15 // pred_region
          %s169 = sand.u32 %s77, 1
          %s170 = scalar_lea.sflag [#allocation6], %s169
          %s171 = sand.u32 %s77, 1
          %s172 = smul.addr %s171, 32
          %s173 = scalar_lea.vmem [#allocation5], %s172
          %s174 = sadd.s32 %s24, %s25
          %p175 = scmp.lt.s32.totalorder %s174, 0
          %s176 = scalar_select %p175, %s174, 0
          %s177 = smul.u32 4, %s176
          %s178 = ssub.s32 2, %s177
          %s179 = smul.u32 128, %s178
          %s181 = ssub.s32 512, %s179
          %182 = vsyncadd %s170, %s181
          %p183 = scmp.ne.s32.totalorder 0, %s179
          %s184 = smul.addr %s177, 128
          %s185 = scalar_lea.hbm %s1, %s184
          %s186 = smul.u32 8, %s178
          %s187 = sshll.u32 %s173, 4
          %s188 = int_to_ptr.vmem [resolvable:$true] %s187
          %s189 = sshll.u32 %s186, 4
          %193 = dma.hbm_to_vmem [thread:$0]  (%p183), %s185, %s189, %s188, %s170, 128, 128, 8
        $region24: #{tpu_custom_call.1} parent=15 // pred_fallthru
          _
      $region16: #{tpu_custom_call.1} parent=5 // pred_fallthru
        _
      %p194 = scmp.le.s32.totalorder 1, %s17
      %p195 = scmp.lt.s32.totalorder %s17, 3
      %p196 = pnand %p194, %p195
      %p197 = pneg %p196
      // Predicated region
      $region25: #{tpu_custom_call.1} parent=5 // pred_check
        _
      $region26: #{tpu_custom_call.1} parent=5 // pred_check_branch
        %199 = sbr.rel (%p196) target = $region28
      $region27: #{tpu_custom_call.1} parent=5 // pred_region
        %s200 = ssub.s32 %s17, 1
        %s201 = sand.u32 %s48, 1
        %s202 = scalar_lea.sflag [#allocation3], %s201
        %s203 = sand.u32 %s48, 1
        %s204 = smul.addr %s203, 32
        %s205 = scalar_lea.vmem [#allocation2], %s204
        // Predicated region
        $region29: #{tpu_custom_call.1} parent=27 // pred_check
          %p206 = pneg %p61
        $region30: #{tpu_custom_call.1} parent=27 // pred_check_branch
          %208 = sbr.rel (%p206) target = $region32
        $region31: #{tpu_custom_call.1} parent=27 // pred_region
          %209 = dma.done %s202, 512
        $region32: #{tpu_custom_call.1} parent=27 // pred_fallthru
          _
        %s210 = sand.u32 %s80, 1
        %s211 = scalar_lea.sflag [#allocation6], %s210
        %s212 = sand.u32 %s80, 1
        %s213 = smul.addr %s212, 32
        %s214 = scalar_lea.vmem [#allocation5], %s213
        // Predicated region
        $region33: #{tpu_custom_call.1} parent=27 // pred_check
          %p215 = pneg %p93
        $region34: #{tpu_custom_call.1} parent=27 // pred_check_branch
          %217 = sbr.rel (%p215) target = $region36
        $region35: #{tpu_custom_call.1} parent=27 // pred_region
          %218 = dma.done %s211, 512
        $region36: #{tpu_custom_call.1} parent=27 // pred_fallthru
          _
        %s219 = sand.u32 %s48, 1
        %s220 = scalar_lea.sflag [#allocation3], %s219
        %s221 = sand.u32 %s48, 1
        %s222 = smul.addr %s221, 32
        %s223 = scalar_lea.vmem [#allocation2], %s222
        %p224 = pneg %p61
        %p225 = pneg %p58
        %s226 = sand.u32 %s80, 1
        %s227 = scalar_lea.sflag [#allocation6], %s226
        %s228 = sand.u32 %s80, 1
        %s229 = smul.addr %s228, 32
        %s230 = scalar_lea.vmem [#allocation5], %s229
        %p231 = pneg %p93
        %p232 = pneg %p90
        %p233 = pneg %p119
        %p234 = pneg %p116
        %s235 = sand.u32 %s106, 1
        %s236 = scalar_lea.sflag [#allocation4], %s235
        %s237 = sand.u32 %s106, 1
        %s238 = smul.addr %s237, 32
        %s239 = scalar_lea.vmem [#allocation7], %s238
        %s240 = sadd.s32 %s26, %s27
        %p241 = scmp.lt.s32.totalorder %s240, 0
        %s242 = scalar_select %p241, %s240, 0
        %s243 = smul.u32 4, %s242
        %s244 = ssub.s32 2, %s243
        %s245 = smul.u32 128, %s244
        %s246 = sadd.s32 %s26, %s27
        %p247 = scmp.lt.s32.totalorder %s246, 0
        %s248 = scalar_select %p247, %s246, 0
        %s249 = smul.u32 4, %s248
        %s250 = ssub.s32 2, %s249
        %s251 = smul.u32 128, %s250
        %s252 = sadd.s32 %s26, %s27
        %p253 = scmp.eq.s32.totalorder %s27, 0
        // Predicated region
        $region37: #{tpu_custom_call.1} parent=27 // pred_check
          %p254 = pneg %p253
        $region38: #{tpu_custom_call.1} parent=27 // pred_check_branch
          %256 = sbr.rel (%p254) target = $region40
        $region39: #{tpu_custom_call.1} parent=27 // pred_region
          %257 = vst [vmem:[%s239] sm:$0xff] 0.0
          %258 = vst [vmem:[%s239 + $0x8] sm:$0xff] 0.0
          %259 = vst [vmem:[%s239 + $0x10] sm:$0xff] 0.0
          %260 = vst [vmem:[%s239 + $0x18] sm:$0xff] 0.0
        $region40: #{tpu_custom_call.1} parent=27 // pred_fallthru
          _
        %s261 = sadd.s32 %s252, 1
        %s262 = smul.u32 %s261, 32
        %p263 = scmp.le.s32.totalorder %s262, 16
        // Predicated region
        $region41: #{tpu_custom_call.1} parent=27 // pred_check
          %p264 = pneg %p263
        $region42: #{tpu_custom_call.1} parent=27 // pred_check_branch
          %266 = sbr.rel (%p264) target = $region44
        $region43: #{tpu_custom_call.1} parent=27 // pred_region
          %v267 = vld [vmem:[%s205] sm:$0xff]
          %v268 = vld [vmem:[%s205 + $0x8] sm:$0xff]
          %v269 = vld [vmem:[%s205 + $0x10] sm:$0xff]
          %v270 = vld [vmem:[%s205 + $0x18] sm:$0xff]
          %v271 = vld [vmem:[%s214] sm:$0xff]
          %v272 = vld [vmem:[%s214 + $0x8] sm:$0xff]
          %v273 = vld [vmem:[%s214 + $0x10] sm:$0xff]
          %v274 = vld [vmem:[%s214 + $0x18] sm:$0xff]
          %v275 = vand.u32 2147483647, %v267
          %v276 = vand.u32 2147483647, %v268
          %v277 = vand.u32 2147483647, %v269
          %v278 = vand.u32 2147483647, %v270
          %v279 = vsub.f32 0.0, %v275
          %v280 = vsub.f32 0.0, %v276
          %v281 = vsub.f32 0.0, %v277
          %v282 = vsub.f32 0.0, %v278
          %v283 = vmul.f32 %v279, 1.442695
          %v284 = vpow.pop %v283
          %v285 = vmul.f32 %v280, 1.442695
          %v286 = vpow.pop %v285
          %v287 = vmul.f32 %v281, 1.442695
          %v288 = vpow.pop %v287
          %v289 = vmul.f32 %v282, 1.442695
          %v290 = vpow.pop %v289
          %v291 = vadd.f32 %v284, 1.0
          %v292 = vadd.f32 %v286, 1.0
          %v293 = vadd.f32 %v288, 1.0
          %v294 = vadd.f32 %v290, 1.0
          %v295 = vrcp.pop %v291
          %v296 = vmul.f32 1.0, %v295
          %v297 = vrcp.pop %v292
          %v298 = vmul.f32 1.0, %v297
          %v299 = vrcp.pop %v293
          %v300 = vmul.f32 1.0, %v299
          %v301 = vrcp.pop %v294
          %v302 = vmul.f32 1.0, %v301
          %vm303 = vcmp.ge.f32.partialorder %v267, 0.0
          %vm304 = vcmp.ge.f32.partialorder %v268, 0.0
          %vm305 = vcmp.ge.f32.partialorder %v269, 0.0
          %vm306 = vcmp.ge.f32.partialorder %v270, 0.0
          %v307 = vmul.f32 %v284, %v296
          %v308 = vmul.f32 %v286, %v298
          %v309 = vmul.f32 %v288, %v300
          %v310 = vmul.f32 %v290, %v302
          %v311 = vsel %vm303, %v296, %v307
          %v312 = vsel %vm304, %v298, %v308
          %v313 = vsel %vm305, %v300, %v309
          %v314 = vsel %vm306, %v302, %v310
          %v315 = vmax.f32 %v267, 0.0
          %v316 = vmax.f32 %v268, 0.0
          %v317 = vmax.f32 %v269, 0.0
          %v318 = vmax.f32 %v270, 0.0
          %v319 = vmul.f32 %v267, %v271
          %v320 = vmul.f32 %v268, %v272
          %v321 = vmul.f32 %v269, %v273
          %v322 = vmul.f32 %v270, %v274
          %v323 = vsub.f32 %v315, %v319
          %v324 = vsub.f32 %v316, %v320
          %v325 = vsub.f32 %v317, %v321
          %v326 = vsub.f32 %v318, %v322
          %v327 = vadd.f32 %v284, 1.0
          %v328 = vlog2.pop %v327
          %v329 = vmul.f32 %v328, 0.6931472
          %v330 = vmul.f32 -0.5, %v284
          %v331 = vadd.f32 %v330, 1.0
          %v332 = vmul.f32 %v331, %v284
          %v333 = vand.u32 2147483647, %v284
          %vm334 = vcmp.lt.f32.partialorder %v333, 0.0004427343
          %v335 = vsel %vm334, %v332, %v329
          %v336 = vadd.f32 %v286, 1.0
          %v337 = vlog2.pop %v336
          %v338 = vmul.f32 %v337, 0.6931472
          %v339 = vmul.f32 -0.5, %v286
          %v340 = vadd.f32 %v339, 1.0
          %v341 = vmul.f32 %v340, %v286
          %v342 = vand.u32 2147483647, %v286
          %vm343 = vcmp.lt.f32.partialorder %v342, 0.0004427343
          %v344 = vsel %vm343, %v341, %v338
          %v345 = vadd.f32 %v288, 1.0
          %v346 = vlog2.pop %v345
          %v347 = vmul.f32 %v346, 0.6931472
          %v348 = vmul.f32 -0.5, %v288
          %v349 = vadd.f32 %v348, 1.0
          %v350 = vmul.f32 %v349, %v288
          %v351 = vand.u32 2147483647, %v288
          %vm352 = vcmp.lt.f32.partialorder %v351, 0.0004427343
          %v353 = vsel %vm352, %v350, %v347
          %v354 = vadd.f32 %v290, 1.0
          %v355 = vlog2.pop %v354
          %v356 = vmul.f32 %v355, 0.6931472
          %v357 = vmul.f32 -0.5, %v290
          %v358 = vadd.f32 %v357, 1.0
          %v359 = vmul.f32 %v358, %v290
          %v360 = vand.u32 2147483647, %v290
          %vm361 = vcmp.lt.f32.partialorder %v360, 0.0004427343
          %v362 = vsel %vm361, %v359, %v356
          %v363 = vadd.f32 %v323, %v335
          %v364 = vadd.f32 %v324, %v344
          %v365 = vadd.f32 %v325, %v353
          %v366 = vadd.f32 %v326, %v362
          %v367 = vmul.f32 %v311, %v271
          %v368 = vmul.f32 %v312, %v272
          %v369 = vmul.f32 %v313, %v273
          %v370 = vmul.f32 %v314, %v274
          %v371 = vadd.f32 %v311, %v271
          %v372 = vadd.f32 %v312, %v272
          %v373 = vadd.f32 %v313, %v273
          %v374 = vadd.f32 %v314, %v274
          %v375 = vsub.f32 1.0, %v371
          %v376 = vsub.f32 1.0, %v372
          %v377 = vsub.f32 1.0, %v373
          %v378 = vsub.f32 1.0, %v374
          %v379 = vmul.f32 %v367, 2.0
          %v380 = vmul.f32 %v368, 2.0
          %v381 = vmul.f32 %v369, 2.0
          %v382 = vmul.f32 %v370, 2.0
          %v383 = vadd.f32 %v375, %v379
          %v384 = vadd.f32 %v376, %v380
          %v385 = vadd.f32 %v377, %v381
          %v386 = vadd.f32 %v378, %v382
          %v387 = vmul.f32 %v383, %v383
          %v388 = vmul.f32 %v384, %v384
          %v389 = vmul.f32 %v385, %v385
          %v390 = vmul.f32 %v386, %v386
          %v391 = vmul.f32 %v387, %v363
          %v392 = vmul.f32 %v388, %v364
          %v393 = vmul.f32 %v389, %v365
          %v394 = vmul.f32 %v390, %v366
          %v395 = vadd.f32 %v311, %v312
          %v396 = vadd.f32 %v395, %v313
          %v397 = vadd.f32 %v396, %v314
          %v398 = vadd.f32 %v397, 0.0
          %v399 = vadd.f32 %v271, %v272
          %v400 = vadd.f32 %v399, %v273
          %v401 = vadd.f32 %v400, %v274
          %v402 = vadd.f32 %v401, 0.0
          %v403 = vadd.f32 %v367, %v368
          %v404 = vadd.f32 %v403, %v369
          %v405 = vadd.f32 %v404, %v370
          %v406 = vadd.f32 %v405, 0.0
          %v407 = vadd.f32 %v391, %v392
          %v408 = vadd.f32 %v407, %v393
          %v409 = vadd.f32 %v408, %v394
          %v410 = vadd.f32 %v409, 0.0
          %v411 = vld [vmem:[%s239] sm:$0xff]
          %v412 = vadd.f32 %v411, %v398
          %413 = vst [vmem:[%s239] sm:$0xff] %v412
          %s414 = scalar_lea.vmem %s239, 8 [#allocation7]
          %v415 = vld [vmem:[%s414] sm:$0xff]
          %v416 = vadd.f32 %v415, %v402
          %417 = vst [vmem:[%s414] sm:$0xff] %v416
          %s418 = scalar_lea.vmem %s239, 16 [#allocation7]
          %v419 = vld [vmem:[%s418] sm:$0xff]
          %v420 = vadd.f32 %v419, %v406
          %421 = vst [vmem:[%s418] sm:$0xff] %v420
          %s422 = scalar_lea.vmem %s239, 24 [#allocation7]
          %v423 = vld [vmem:[%s422] sm:$0xff]
          %v424 = vadd.f32 %v423, %v410
          %425 = vst [vmem:[%s422] sm:$0xff] %v424
        $region44: #{tpu_custom_call.1} parent=27 // pred_fallthru
          _
        %p426 = scmp.gt.s32.totalorder %s262, 16
        %s427 = smul.u32 %s252, 32
        %p428 = scmp.lt.s32.totalorder %s427, 16
        %p429 = pnand %p426, %p428
        %p430 = pneg %p429
        // Predicated region
        $region45: #{tpu_custom_call.1} parent=27 // pred_check
          _
        $region46: #{tpu_custom_call.1} parent=27 // pred_check_branch
          %432 = sbr.rel (%p429) target = $region48
        $region47: #{tpu_custom_call.1} parent=27 // pred_region
          %v433 = vld [vmem:[%s205] sm:$0xff]
          %v434 = vld [vmem:[%s205 + $0x8] sm:$0xff]
          %v435 = vld [vmem:[%s205 + $0x10] sm:$0xff]
          %v436 = vld [vmem:[%s205 + $0x18] sm:$0xff]
          %v437 = vld [vmem:[%s214] sm:$0xff]
          %v438 = vld [vmem:[%s214 + $0x8] sm:$0xff]
          %v439 = vld [vmem:[%s214 + $0x10] sm:$0xff]
          %v440 = vld [vmem:[%s214 + $0x18] sm:$0xff]
          %v441 = vand.u32 2147483647, %v433
          %v442 = vand.u32 2147483647, %v434
          %v443 = vand.u32 2147483647, %v435
          %v444 = vand.u32 2147483647, %v436
          %v445 = vsub.f32 0.0, %v441
          %v446 = vsub.f32 0.0, %v442
          %v447 = vsub.f32 0.0, %v443
          %v448 = vsub.f32 0.0, %v444
          %v449 = vmul.f32 %v445, 1.442695
          %v450 = vpow.pop %v449
          %v451 = vmul.f32 %v446, 1.442695
          %v452 = vpow.pop %v451
          %v453 = vmul.f32 %v447, 1.442695
          %v454 = vpow.pop %v453
          %v455 = vmul.f32 %v448, 1.442695
          %v456 = vpow.pop %v455
          %v457 = vadd.f32 %v450, 1.0
          %v458 = vadd.f32 %v452, 1.0
          %v459 = vadd.f32 %v454, 1.0
          %v460 = vadd.f32 %v456, 1.0
          %v461 = vrcp.pop %v457
          %v462 = vmul.f32 1.0, %v461
          %v463 = vrcp.pop %v458
          %v464 = vmul.f32 1.0, %v463
          %v465 = vrcp.pop %v459
          %v466 = vmul.f32 1.0, %v465
          %v467 = vrcp.pop %v460
          %v468 = vmul.f32 1.0, %v467
          %vm469 = vcmp.ge.f32.partialorder %v433, 0.0
          %vm470 = vcmp.ge.f32.partialorder %v434, 0.0
          %vm471 = vcmp.ge.f32.partialorder %v435, 0.0
          %vm472 = vcmp.ge.f32.partialorder %v436, 0.0
          %v473 = vmul.f32 %v450, %v462
          %v474 = vmul.f32 %v452, %v464
          %v475 = vmul.f32 %v454, %v466
          %v476 = vmul.f32 %v456, %v468
          %v477 = vsel %vm469, %v462, %v473
          %v478 = vsel %vm470, %v464, %v474
          %v479 = vsel %vm471, %v466, %v475
          %v480 = vsel %vm472, %v468, %v476
          %v481 = vmax.f32 %v433, 0.0
          %v482 = vmax.f32 %v434, 0.0
          %v483 = vmax.f32 %v435, 0.0
          %v484 = vmax.f32 %v436, 0.0
          %v485 = vmul.f32 %v433, %v437
          %v486 = vmul.f32 %v434, %v438
          %v487 = vmul.f32 %v435, %v439
          %v488 = vmul.f32 %v436, %v440
          %v489 = vsub.f32 %v481, %v485
          %v490 = vsub.f32 %v482, %v486
          %v491 = vsub.f32 %v483, %v487
          %v492 = vsub.f32 %v484, %v488
          %v493 = vadd.f32 %v450, 1.0
          %v494 = vlog2.pop %v493
          %v495 = vmul.f32 %v494, 0.6931472
          %v496 = vmul.f32 -0.5, %v450
          %v497 = vadd.f32 %v496, 1.0
          %v498 = vmul.f32 %v497, %v450
          %v499 = vand.u32 2147483647, %v450
          %vm500 = vcmp.lt.f32.partialorder %v499, 0.0004427343
          %v501 = vsel %vm500, %v498, %v495
          %v502 = vadd.f32 %v452, 1.0
          %v503 = vlog2.pop %v502
          %v504 = vmul.f32 %v503, 0.6931472
          %v505 = vmul.f32 -0.5, %v452
          %v506 = vadd.f32 %v505, 1.0
          %v507 = vmul.f32 %v506, %v452
          %v508 = vand.u32 2147483647, %v452
          %vm509 = vcmp.lt.f32.partialorder %v508, 0.0004427343
          %v510 = vsel %vm509, %v507, %v504
          %v511 = vadd.f32 %v454, 1.0
          %v512 = vlog2.pop %v511
          %v513 = vmul.f32 %v512, 0.6931472
          %v514 = vmul.f32 -0.5, %v454
          %v515 = vadd.f32 %v514, 1.0
          %v516 = vmul.f32 %v515, %v454
          %v517 = vand.u32 2147483647, %v454
          %vm518 = vcmp.lt.f32.partialorder %v517, 0.0004427343
          %v519 = vsel %vm518, %v516, %v513
          %v520 = vadd.f32 %v456, 1.0
          %v521 = vlog2.pop %v520
          %v522 = vmul.f32 %v521, 0.6931472
          %v523 = vmul.f32 -0.5, %v456
          %v524 = vadd.f32 %v523, 1.0
          %v525 = vmul.f32 %v524, %v456
          %v526 = vand.u32 2147483647, %v456
          %vm527 = vcmp.lt.f32.partialorder %v526, 0.0004427343
          %v528 = vsel %vm527, %v525, %v522
          %v529 = vadd.f32 %v489, %v501
          %v530 = vadd.f32 %v490, %v510
          %v531 = vadd.f32 %v491, %v519
          %v532 = vadd.f32 %v492, %v528
          %v533 = vmul.f32 %v477, %v437
          %v534 = vmul.f32 %v478, %v438
          %v535 = vmul.f32 %v479, %v439
          %v536 = vmul.f32 %v480, %v440
          %v537 = vadd.f32 %v477, %v437
          %v538 = vadd.f32 %v478, %v438
          %v539 = vadd.f32 %v479, %v439
          %v540 = vadd.f32 %v480, %v440
          %v541 = vsub.f32 1.0, %v537
          %v542 = vsub.f32 1.0, %v538
          %v543 = vsub.f32 1.0, %v539
          %v544 = vsub.f32 1.0, %v540
          %v545 = vmul.f32 %v533, 2.0
          %v546 = vmul.f32 %v534, 2.0
          %v547 = vmul.f32 %v535, 2.0
          %v548 = vmul.f32 %v536, 2.0
          %v549 = vadd.f32 %v541, %v545
          %v550 = vadd.f32 %v542, %v546
          %v551 = vadd.f32 %v543, %v547
          %v552 = vadd.f32 %v544, %v548
          %v553 = vmul.f32 %v549, %v549
          %v554 = vmul.f32 %v550, %v550
          %v555 = vmul.f32 %v551, %v551
          %v556 = vmul.f32 %v552, %v552
          %v557 = vmul.f32 %v553, %v529
          %v558 = vmul.f32 %v554, %v530
          %v559 = vmul.f32 %v555, %v531
          %v560 = vmul.f32 %v556, %v532
          %v561 = vlaneseq
          %v562 = vshrl.u32 %v561, 7
          %v563 = vadd.s32 %v562, 8
          %v564 = vadd.s32 %v562, 16
          %v565 = vadd.s32 %v562, 24
          %v566 = vstv %s427
          %v567 = vadd.s32 %v566, %v562
          %v568 = vadd.s32 %v566, %v563
          %v569 = vadd.s32 %v566, %v564
          %v570 = vadd.s32 %v566, %v565
          %vm571 = vcmp.lt.s32.totalorder %v567, 16
          %vm572 = vcmp.lt.s32.totalorder %v568, 16
          %vm573 = vcmp.lt.s32.totalorder %v569, 16
          %vm574 = vcmp.lt.s32.totalorder %v570, 16
          %v575 = vsel %vm571, %v477, 0.0
          %v576 = vsel %vm572, %v478, 0.0
          %v577 = vsel %vm573, %v479, 0.0
          %v578 = vsel %vm574, %v480, 0.0
          %v579 = vsel %vm571, %v437, 0.0
          %v580 = vsel %vm572, %v438, 0.0
          %v581 = vsel %vm573, %v439, 0.0
          %v582 = vsel %vm574, %v440, 0.0
          %v583 = vsel %vm571, %v533, 0.0
          %v584 = vsel %vm572, %v534, 0.0
          %v585 = vsel %vm573, %v535, 0.0
          %v586 = vsel %vm574, %v536, 0.0
          %v587 = vsel %vm571, %v557, 0.0
          %v588 = vsel %vm572, %v558, 0.0
          %v589 = vsel %vm573, %v559, 0.0
          %v590 = vsel %vm574, %v560, 0.0
          %v591 = vadd.f32 %v575, %v576
          %v592 = vadd.f32 %v591, %v577
          %v593 = vadd.f32 %v592, %v578
          %v594 = vadd.f32 %v593, 0.0
          %v595 = vadd.f32 %v579, %v580
          %v596 = vadd.f32 %v595, %v581
          %v597 = vadd.f32 %v596, %v582
          %v598 = vadd.f32 %v597, 0.0
          %v599 = vadd.f32 %v583, %v584
          %v600 = vadd.f32 %v599, %v585
          %v601 = vadd.f32 %v600, %v586
          %v602 = vadd.f32 %v601, 0.0
          %v603 = vadd.f32 %v587, %v588
          %v604 = vadd.f32 %v603, %v589
          %v605 = vadd.f32 %v604, %v590
          %v606 = vadd.f32 %v605, 0.0
          %v607 = vld [vmem:[%s239] sm:$0xff]
          %v608 = vadd.f32 %v607, %v594
          %609 = vst [vmem:[%s239] sm:$0xff] %v608
          %s610 = scalar_lea.vmem %s239, 8 [#allocation7]
          %v611 = vld [vmem:[%s610] sm:$0xff]
          %v612 = vadd.f32 %v611, %v598
          %613 = vst [vmem:[%s610] sm:$0xff] %v612
          %s614 = scalar_lea.vmem %s239, 16 [#allocation7]
          %v615 = vld [vmem:[%s614] sm:$0xff]
          %v616 = vadd.f32 %v615, %v602
          %617 = vst [vmem:[%s614] sm:$0xff] %v616
          %s618 = scalar_lea.vmem %s239, 24 [#allocation7]
          %v619 = vld [vmem:[%s618] sm:$0xff]
          %v620 = vadd.f32 %v619, %v606
          %621 = vst [vmem:[%s618] sm:$0xff] %v620
        $region48: #{tpu_custom_call.1} parent=27 // pred_fallthru
          _
        %s622 = sand.u32 %s106, 1
        %s623 = scalar_lea.sflag [#allocation4], %s622
        %s624 = sand.u32 %s106, 1
        %s625 = smul.addr %s624, 32
        %s626 = scalar_lea.vmem [#allocation7], %s625
        // Predicated region
        $region49: #{tpu_custom_call.1} parent=27 // pred_check
          %p627 = pneg %p116
        $region50: #{tpu_custom_call.1} parent=27 // pred_check_branch
          %629 = sbr.rel (%p627) target = $region52
        $region51: #{tpu_custom_call.1} parent=27 // pred_region
          %s631 = ssub.s32 512, 512
          %632 = vsyncadd %s623, %s631
          %s633 = smul.addr %s26, 128
          %s634 = scalar_lea.hbm %s2, %s633
          %s635 = sshll.u32 %s626, 4
          %s636 = int_to_ptr.vmem [resolvable:$true] %s635
          %641 = dma.vmem_to_hbm [thread:$0]  %s636, 512, %s634, %s623, 128, 256, 8
        $region52: #{tpu_custom_call.1} parent=27 // pred_fallthru
          _
      $region28: #{tpu_custom_call.1} parent=5 // pred_fallthru
        _
      %p642 = scmp.le.s32.totalorder 2, %s17
      // Predicated region
      $region53: #{tpu_custom_call.1} parent=5 // pred_check
        %p643 = pneg %p642
      $region54: #{tpu_custom_call.1} parent=5 // pred_check_branch
        %645 = sbr.rel (%p643) target = $region56
      $region55: #{tpu_custom_call.1} parent=5 // pred_region
        %s646 = ssub.s32 %s17, 2
        // Predicated region
        $region57: #{tpu_custom_call.1} parent=55 // pred_check
          %p647 = pneg %p122
        $region58: #{tpu_custom_call.1} parent=55 // pred_check_branch
          %649 = sbr.rel (%p647) target = $region60
        $region59: #{tpu_custom_call.1} parent=55 // pred_region
          %s650 = sand.u32 %s107, 1
          %s651 = scalar_lea.sflag [#allocation4], %s650
          %s652 = sand.u32 %s107, 1
          %s653 = smul.addr %s652, 32
          %s654 = scalar_lea.vmem [#allocation7], %s653
          %655 = dma.done %s651, 512
        $region60: #{tpu_custom_call.1} parent=55 // pred_fallthru
          _
      $region56: #{tpu_custom_call.1} parent=5 // pred_fallthru
        _
    $region6: #{tpu_custom_call.1} parent=1 // loop_footer
      %s21 = sadd.s32 1, %s17
    $region7: #{tpu_custom_call.1} parent=1 // loop_footer_branch
      %16 = sbr.rel target = $region3
    $region8: #{tpu_custom_call.1} parent=1 // loop_exit
      _
    %656 = vsyncpa [#allocation3], 1
    %s657 = scalar_lea.sflag [#allocation3], 1
    %658 = vsyncpa %s657, 1
    %659 = vsyncpa [#allocation6], 1
    %s660 = scalar_lea.sflag [#allocation6], 1
    %661 = vsyncpa %s660, 1
    %662 = vsyncpa [#allocation4], 1
    %s663 = scalar_lea.sflag [#allocation4], 1
    %664 = vsyncpa %s663, 1

</llo_original>
